<compile_context>
chip_gen: v7x
topology: tpu7x:2x2x1
jax: 0.10.0
libtpu: 0.0.40
codegen_flags: <defaults>
</compile_context>

<pallas_src>
import functools

import jax
import jax.numpy as jnp
from jax.experimental import pallas as pl
from jax.experimental.pallas import tpu as pltpu

_RMSNORM_EPS = 1.1920928955078125e-07  # torch.finfo(torch.float32).eps (nn.RMSNorm default)


def _round_up(v, m):
    return (v + m - 1) // m * m


@functools.lru_cache(maxsize=1)
def _vmem_capacity_bytes():
    try:
        return int(pltpu.get_tpu_info().vmem_capacity_bytes)
    except Exception:  # query unavailable: assume v5e/v6e-class VMEM
        return 128 << 20


def _shrinkage_kernel(x_ref, w1_ref, b1_ref, g_ref, w2_ref, b2_ref, o_ref, *,
                      inv_h, n_sub, mm_dtype):
    """One row block: full Shrinkage forward, split into n_sub row sub-tiles."""
    tm = x_ref.shape[0]
    sub = tm // n_sub
    # Static Python loop (fully unrolled): the scheduler can overlap the MXU
    # work of sub-tile j+1 with the VPU/EUP chain of sub-tile j.
    for j in range(n_sub):
        rows = pl.ds(j * sub, sub)
        xin = x_ref[rows, :]                                    # (sub, H), native dtype

        # AdaptiveAvgPool1d(1): mean of |x| over the TRUE hidden size.
        # Only this (sub, 1) vector must stay live across the MLP below.
        avg = jnp.sum(jnp.abs(xin.astype(jnp.float32)), axis=-1,
                      keepdims=True) * inv_h                    # (sub, 1)

        # fc[0]: Linear1 -- low-precision MXU operands, f32 accumulation.
        xmm = xin if xin.dtype == jnp.dtype(mm_dtype) else xin.astype(mm_dtype)
        h = jnp.dot(xmm, w1_ref[...],
                    preferred_element_type=jnp.float32) + b1_ref[...]

        # fc[1]: RMSNorm over the true H (padded output lanes of h are exactly 0).
        ms = jnp.sum(h * h, axis=-1, keepdims=True) * inv_h
        h = h * jax.lax.rsqrt(ms + _RMSNORM_EPS) * g_ref[...]

        # fc[2]: ReLU (f32 elementwise path throughout -- required on v5e).
        h = jnp.maximum(h, 0.0)

        # fc[3]: Linear2.
        h = jnp.dot(h.astype(mm_dtype), w2_ref[...],
                    preferred_element_type=jnp.float32) + b2_ref[...]
        gate = jax.nn.sigmoid(h)

        # Epilogue: re-read x (cheap VMEM reload) instead of holding x / |x|
        # live across both matmuls.
        x = x_ref[rows, :].astype(jnp.float32)
        mag = jnp.maximum(jnp.abs(x) - avg * gate, 0.0)
        # sign(x) * mag without jnp.sign: mag == 0 whenever x == 0 (avg*gate >= 0),
        # so a plain sign-copy (one compare + one select) is exactly equivalent.
        o_ref[rows, :] = jnp.where(x < 0.0, -mag, mag).astype(o_ref.dtype)


@functools.partial(jax.jit,
                   static_argnames=("tm_eff", "n_sub", "vmem_limit", "mm_dtype"))
def _shrinkage_call(x, w1_t, b1, g, w2_t, b2, *, tm_eff, n_sub, vmem_limit, mm_dtype):
    B, S, H = x.shape
    N = B * S
    Hp = _round_up(H, 128)
    pad_h = Hp - H

    xf = x.reshape(N, H)  # reshape only -- no pad / slice HBM passes on activations

    # Lane-pad only the (tiny) parameters.  Padded Linear1 output columns,
    # bias / gain lanes and Linear2 input rows are zero and both row reductions
    # divide by the true H, so semantics are exact.
    w1p = jnp.pad(w1_t, ((0, 0), (0, pad_h))) if pad_h else w1_t        # (H, Hp)
    w2p = jnp.pad(w2_t, ((0, pad_h), (0, 0))) if pad_h else w2_t        # (Hp, H)
    b1p = (jnp.pad(b1, (0, pad_h)) if pad_h else b1).reshape(1, Hp).astype(jnp.float32)
    gp = (jnp.pad(g, (0, pad_h)) if pad_h else g).reshape(1, Hp).astype(jnp.float32)
    b2p = b2.reshape(1, H).astype(jnp.float32)

    w1p = w1p.astype(mm_dtype)
    w2p = w2p.astype(mm_dtype)

    grid = (pl.cdiv(N, tm_eff),)
    itemsize = jnp.dtype(x.dtype).itemsize
    wsize = jnp.dtype(mm_dtype).itemsize

    cost = pl.CostEstimate(
        flops=4 * N * H * H,                                   # two (N,H)x(H,H) matmuls
        transcendentals=N * (H + 1),                           # sigmoid + rsqrt
        bytes_accessed=2 * N * H * itemsize + 2 * H * Hp * wsize + (2 * Hp + H) * 4,
    )

    kernel = functools.partial(_shrinkage_kernel, inv_h=1.0 / H, n_sub=n_sub,
                               mm_dtype=mm_dtype)
    resident = pl.Buffered(1)  # block index never changes: single buffer is enough

    out = pl.pallas_call(
        kernel,
        out_shape=jax.ShapeDtypeStruct((N, H), x.dtype),
        grid_spec=pltpu.PrefetchScalarGridSpec(
            num_scalar_prefetch=0,
            grid=grid,
            in_specs=[
                pl.BlockSpec((tm_eff, H), lambda i: (i, 0)),                       # x rows
                pl.BlockSpec((H, Hp), lambda i: (0, 0), pipeline_mode=resident),   # w1^T
                pl.BlockSpec((1, Hp), lambda i: (0, 0), pipeline_mode=resident),   # b1
                pl.BlockSpec((1, Hp), lambda i: (0, 0), pipeline_mode=resident),   # RMSNorm gain
                pl.BlockSpec((Hp, H), lambda i: (0, 0), pipeline_mode=resident),   # w2^T
                pl.BlockSpec((1, H), lambda i: (0, 0), pipeline_mode=resident),    # b2
            ],
            out_specs=pl.BlockSpec((tm_eff, H), lambda i: (i, 0)),
        ),
        compiler_params=pltpu.CompilerParams(
            dimension_semantics=("parallel",),
            vmem_limit_bytes=vmem_limit,
        ),
        cost_estimate=cost,
    )(xf, w1p, b1p, gp, w2p, b2p)

    return out.reshape(B, S, H)


def shrinkage(x, w1_t, b1, g, w2_t, b2, *, tm=None, n_sub=None, mm_dtype=jnp.bfloat16):
    """x: (B, S, H). w1_t / w2_t: (H, H) pre-transposed Linear weights. b1/g/b2: (H,).

    mm_dtype: MXU operand dtype (bf16 by default; pass jnp.float32 for a
    strict-precision path at higher MXU cost).
    """
    B, S, H = x.shape
    N = B * S
    Hp = _round_up(H, 128)
    itemsize = jnp.dtype(x.dtype).itemsize
    wsize = jnp.dtype(mm_dtype).itemsize

    cap = _vmem_capacity_bytes()
    # Never request the full VMEM: leave headroom for Mosaic internal scratch.
    vmem_limit = max(int(min(cap * 7 // 8, cap - (8 << 20))), 32 << 20)

    if tm is None:
        # v5e/v6e (128 MiB VMEM) can afford tm=1024 at moderate H; keep 512 on
        # v7x (64 MiB per-TC VMEM).
        tm = 1024 if (cap >= (96 << 20) and H <= 1024) else 512

    def vmem_need(t):
        return (2 * t * H * itemsize          # x row tile, double buffered
                + 2 * t * H * itemsize        # out row tile, double buffered
                + 2 * H * Hp * wsize          # both weights, single buffered
                + (2 * Hp + H) * 4            # bias / gain vectors
                + 3 * t * Hp * 4)             # live f32 intermediates in the body

    # Clamp the row tile so the estimate (including f32 temporaries) fits.
    while tm > 64 and vmem_need(tm) > vmem_limit:
        tm //= 2
    # TODO(synk): for Hp >= ~1792 on v7x (>= ~3072 on v5e/v6e) the resident
    # (H, Hp) weights no longer fit even single-buffered; add an "arbitrary"
    # K/N grid axis (or an inner pltpu.emit_pipeline) over Hp-chunks of w1/w2.
    # TODO(synk): v5e is MXU-bound for H >~ 480; an int8 weight path with
    # per-channel scales is the remaining large lever there (accuracy opt-in).

    # At least 2 balanced row blocks (when possible) so both v7x TensorCores
    # get work and there is no full-tile + tiny-remainder imbalance.
    if N <= 8:
        tm_eff = max(N, 1)
    else:
        n_steps = max(2, pl.cdiv(N, tm))
        tm_eff = min(tm, _round_up(pl.cdiv(N, n_steps), 8))

    if n_sub is None:
        # Overlap MXU and VPU/EUP phases where their times are comparable.
        n_sub = 2 if 512 <= H <= 1536 else 1
    if n_sub > 1 and (tm_eff % (8 * n_sub) != 0):
        n_sub = 1

    return _shrinkage_call(x, w1_t, b1, g, w2_t, b2,
                           tm_eff=int(tm_eff), n_sub=int(n_sub),
                           vmem_limit=int(vmem_limit), mm_dtype=mm_dtype)


def _reference(x, w1_t, b1, g, w2_t, b2, mm_dtype=jnp.bfloat16):
    """Pure-JAX reference using the same low-precision-matmul / f32-accumulate recipe."""
    B, S, H = x.shape
    xf = x.reshape(B * S, H).astype(jnp.float32)
    x_abs = jnp.abs(xf)
    avg = jnp.mean(x_abs, axis=-1, keepdims=True)
    h = jnp.dot(xf.astype(mm_dtype), w1_t.astype(mm_dtype),
                preferred_element_type=jnp.float32) + b1[None, :]
    h = h * jax.lax.rsqrt(jnp.mean(h * h, axis=-1, keepdims=True) + _RMSNORM_EPS) * g[None, :]
    h = jnp.maximum(h, 0.0)
    h = jnp.dot(h.astype(mm_dtype), w2_t.astype(mm_dtype),
                preferred_element_type=jnp.float32) + b2[None, :]
    gate = jax.nn.sigmoid(h)
    mag = jnp.maximum(x_abs - avg * gate, 0.0)
    out = jnp.sign(xf) * mag
    return out.reshape(B, S, H)


if __name__ == "__main__":
    key = jax.random.PRNGKey(0)

    def make_case(k, B, S, H):
        kx, kw1, kw2 = jax.random.split(k, 3)
        x = jax.random.normal(kx, (B, S, H), dtype=jnp.float32)
        # TODO(synk): the module's weight_init is defined outside the spec; use
        # small Gaussian Linear weights, zero biases, unit RMSNorm gain instead.
        w1_t = 0.05 * jax.random.normal(kw1, (H, H), dtype=jnp.float32)  # Linear1 weight^T
        b1 = jnp.zeros((H,), dtype=jnp.float32)
        g = jnp.ones((H,), dtype=jnp.float32)                            # RMSNorm gain
        w2_t = 0.05 * jax.random.normal(kw2, (H, H), dtype=jnp.float32)  # Linear2 weight^T
        b2 = jnp.zeros((H,), dtype=jnp.float32)
        return x, w1_t, b1, g, w2_t, b2

    k1, k2 = jax.random.split(key)

    # Case 1: hidden_dim not a multiple of 128 (ragged-lane path, n_sub=1).
    args1 = make_case(k1, 2, 8, 32)
    out1 = jax.block_until_ready(shrinkage(*args1))
    ref1 = _reference(*args1)
    assert out1.shape == args1[0].shape
    assert jnp.allclose(out1, ref1, atol=1e-4, rtol=1e-3), "mismatch vs reference (H=32)"

    # Case 2: lane-dense H exercising the sub-tiled (n_sub=2) kernel body.
    args2 = make_case(k2, 2, 32, 128)
    out2 = jax.block_until_ready(shrinkage(*args2, n_sub=2))
    ref2 = _reference(*args2)
    assert out2.shape == args2[0].shape
    assert jnp.allclose(out2, ref2, atol=1e-4, rtol=1e-3), "mismatch vs reference (H=128)"

    print("KERNEL_OK")
</pallas_src>

<mosaic_0001>
module attributes {stable_mosaic.version = 11 : i64} {
  func.func @_shrinkage_kernel(%arg0: i32, %arg1: memref<8x32xf32, #tpu.memory_space<vmem>>, %arg2: memref<32x128xbf16, #tpu.memory_space<vmem>>, %arg3: memref<1x128xf32, #tpu.memory_space<vmem>>, %arg4: memref<1x128xf32, #tpu.memory_space<vmem>>, %arg5: memref<128x32xbf16, #tpu.memory_space<vmem>>, %arg6: memref<1x32xf32, #tpu.memory_space<vmem>>, %arg7: memref<8x32xf32, #tpu.memory_space<vmem>>) attributes {dimension_semantics = [#tpu.dimension_semantics<parallel>], iteration_bounds = array<i64: 2>, scalar_prefetch = 0 : i64, scratch_operands = 0 : i64, tpu.core_type = #tpu.core_type<tc>, window_params = [{transform_indices = @transform_0, window_bounds = array<i64: 8, 32>}, {pipeline_mode = #tpu.pipeline_mode<synchronous>, transform_indices = @transform_1, window_bounds = array<i64: 32, 128>}, {pipeline_mode = #tpu.pipeline_mode<synchronous>, transform_indices = @transform_2, window_bounds = array<i64: 1, 128>}, {pipeline_mode = #tpu.pipeline_mode<synchronous>, transform_indices = @transform_3, window_bounds = array<i64: 1, 128>}, {pipeline_mode = #tpu.pipeline_mode<synchronous>, transform_indices = @transform_4, window_bounds = array<i64: 128, 32>}, {pipeline_mode = #tpu.pipeline_mode<synchronous>, transform_indices = @transform_5, window_bounds = array<i64: 1, 32>}, {transform_indices = @transform_6, window_bounds = array<i64: 8, 32>}]} {
    %c0 = arith.constant 0 : index
    %c0_0 = arith.constant 0 : index
    %0 = vector.load %arg1[%c0, %c0_0] : memref<8x32xf32, #tpu.memory_space<vmem>>, vector<8x32xf32>
    %1 = math.absf %0 : vector<8x32xf32>
    %cst = arith.constant dense<0.000000e+00> : vector<8xf32>
    %2 = vector.multi_reduction <add>, %1, %cst [1] : vector<8x32xf32> to vector<8xf32>
    %3 = vector.shape_cast %2 : vector<8xf32> to vector<8x1xf32>
    %cst_1 = arith.constant 3.125000e-02 : f32
    %4 = vector.broadcast %cst_1 : f32 to vector<8x1xf32>
    %5 = arith.mulf %3, %4 : vector<8x1xf32>
    %6 = arith.truncf %0 : vector<8x32xf32> to vector<8x32xbf16>
    %c0_2 = arith.constant 0 : index
    %c0_3 = arith.constant 0 : index
    %7 = vector.load %arg2[%c0_2, %c0_3] : memref<32x128xbf16, #tpu.memory_space<vmem>>, vector<32x128xbf16>
    %cst_4 = arith.constant dense<0.000000e+00> : vector<8x128xf32>
    %8 = tpu.matmul %6, %7, %cst_4 {dimension_numbers = #tpu.dot_dimension_numbers<[1], [0], [0], [1], [0, 0, 1, 1], [], []>} : vector<8x32xbf16>, vector<32x128xbf16>, vector<8x128xf32> -> vector<8x128xf32>
    %c0_5 = arith.constant 0 : index
    %c0_6 = arith.constant 0 : index
    %9 = vector.load %arg3[%c0_5, %c0_6] : memref<1x128xf32, #tpu.memory_space<vmem>>, vector<1x128xf32>
    %10 = vector.broadcast %9 : vector<1x128xf32> to vector<8x128xf32>
    %11 = arith.addf %8, %10 : vector<8x128xf32>
    %12 = arith.mulf %11, %11 : vector<8x128xf32>
    %cst_7 = arith.constant dense<0.000000e+00> : vector<8xf32>
    %13 = vector.multi_reduction <add>, %12, %cst_7 [1] : vector<8x128xf32> to vector<8xf32>
    %14 = vector.shape_cast %13 : vector<8xf32> to vector<8x1xf32>
    %cst_8 = arith.constant 3.125000e-02 : f32
    %15 = vector.broadcast %cst_8 : f32 to vector<8x1xf32>
    %16 = arith.mulf %14, %15 : vector<8x1xf32>
    %cst_9 = arith.constant 1.1920929E-7 : f32
    %17 = vector.broadcast %cst_9 : f32 to vector<8x1xf32>
    %18 = arith.addf %16, %17 : vector<8x1xf32>
    %19 = math.rsqrt %18 : vector<8x1xf32>
    %20 = vector.broadcast %19 : vector<8x1xf32> to vector<8x128xf32>
    %21 = arith.mulf %11, %20 : vector<8x128xf32>
    %c0_10 = arith.constant 0 : index
    %c0_11 = arith.constant 0 : index
    %22 = vector.load %arg4[%c0_10, %c0_11] : memref<1x128xf32, #tpu.memory_space<vmem>>, vector<1x128xf32>
    %23 = vector.broadcast %22 : vector<1x128xf32> to vector<8x128xf32>
    %24 = arith.mulf %21, %23 : vector<8x128xf32>
    %cst_12 = arith.constant 0.000000e+00 : f32
    %25 = vector.broadcast %cst_12 : f32 to vector<8x128xf32>
    %26 = arith.maximumf %24, %25 : vector<8x128xf32>
    %27 = arith.truncf %26 : vector<8x128xf32> to vector<8x128xbf16>
    %c0_13 = arith.constant 0 : index
    %c0_14 = arith.constant 0 : index
    %28 = vector.load %arg5[%c0_13, %c0_14] : memref<128x32xbf16, #tpu.memory_space<vmem>>, vector<128x32xbf16>
    %cst_15 = arith.constant dense<0.000000e+00> : vector<8x32xf32>
    %29 = tpu.matmul %27, %28, %cst_15 {dimension_numbers = #tpu.dot_dimension_numbers<[1], [0], [0], [1], [0, 0, 1, 1], [], []>} : vector<8x128xbf16>, vector<128x32xbf16>, vector<8x32xf32> -> vector<8x32xf32>
    %c0_16 = arith.constant 0 : index
    %c0_17 = arith.constant 0 : index
    %30 = vector.load %arg6[%c0_16, %c0_17] : memref<1x32xf32, #tpu.memory_space<vmem>>, vector<1x32xf32>
    %31 = vector.broadcast %30 : vector<1x32xf32> to vector<8x32xf32>
    %32 = arith.addf %29, %31 : vector<8x32xf32>
    %33 = arith.negf %32 : vector<8x32xf32>
    %34 = math.exp %33 : vector<8x32xf32>
    %cst_18 = arith.constant 1.000000e+00 : f32
    %35 = vector.broadcast %cst_18 : f32 to vector<8x32xf32>
    %36 = arith.addf %35, %34 : vector<8x32xf32>
    %37 = arith.divf %35, %36 : vector<8x32xf32>
    %c0_19 = arith.constant 0 : index
    %c0_20 = arith.constant 0 : index
    %38 = vector.load %arg1[%c0_19, %c0_20] : memref<8x32xf32, #tpu.memory_space<vmem>>, vector<8x32xf32>
    %39 = math.absf %38 : vector<8x32xf32>
    %40 = vector.broadcast %5 : vector<8x1xf32> to vector<8x32xf32>
    %41 = arith.mulf %40, %37 : vector<8x32xf32>
    %42 = arith.subf %39, %41 : vector<8x32xf32>
    %cst_21 = arith.constant 0.000000e+00 : f32
    %43 = vector.broadcast %cst_21 : f32 to vector<8x32xf32>
    %44 = arith.maximumf %42, %43 : vector<8x32xf32>
    %cst_22 = arith.constant 0.000000e+00 : f32
    %45 = vector.broadcast %cst_22 : f32 to vector<8x32xf32>
    %46 = arith.cmpf olt, %38, %45 : vector<8x32xf32>
    %cst_23 = arith.constant 0.000000e+00 : f32
    %47 = vector.broadcast %cst_23 : f32 to vector<8x32xf32>
    %48 = arith.subf %47, %44 : vector<8x32xf32>
    %49 = arith.select %46, %48, %44 : vector<8x32xi1>, vector<8x32xf32>
    %c0_24 = arith.constant 0 : index
    %c0_25 = arith.constant 0 : index
    %50 = vector.load %arg7[%c0_24, %c0_25] : memref<8x32xf32, #tpu.memory_space<vmem>>, vector<8x32xf32>
    tpu.vector_store %arg7[%c0_24, %c0_25], %49 {strides = array<i32>} : memref<8x32xf32, #tpu.memory_space<vmem>>, vector<8x32xf32>,
    return
  }
  func.func @transform_0(%arg0: i32) -> (i32, i32) {
    %c0_i32 = arith.constant 0 : i32
    %c0_i32_0 = arith.constant 0 : i32
    return %arg0, %c0_i32 : i32, i32
  }
  func.func @transform_1(%arg0: i32) -> (i32, i32) {
    %c0_i32 = arith.constant 0 : i32
    %c0_i32_0 = arith.constant 0 : i32
    %c0_i32_1 = arith.constant 0 : i32
    return %c0_i32, %c0_i32_0 : i32, i32
  }
  func.func @transform_2(%arg0: i32) -> (i32, i32) {
    %c0_i32 = arith.constant 0 : i32
    %c0_i32_0 = arith.constant 0 : i32
    %c0_i32_1 = arith.constant 0 : i32
    return %c0_i32, %c0_i32_0 : i32, i32
  }
  func.func @transform_3(%arg0: i32) -> (i32, i32) {
    %c0_i32 = arith.constant 0 : i32
    %c0_i32_0 = arith.constant 0 : i32
    %c0_i32_1 = arith.constant 0 : i32
    return %c0_i32, %c0_i32_0 : i32, i32
  }
  func.func @transform_4(%arg0: i32) -> (i32, i32) {
    %c0_i32 = arith.constant 0 : i32
    %c0_i32_0 = arith.constant 0 : i32
    %c0_i32_1 = arith.constant 0 : i32
    return %c0_i32, %c0_i32_0 : i32, i32
  }
  func.func @transform_5(%arg0: i32) -> (i32, i32) {
    %c0_i32 = arith.constant 0 : i32
    %c0_i32_0 = arith.constant 0 : i32
    %c0_i32_1 = arith.constant 0 : i32
    return %c0_i32, %c0_i32_0 : i32, i32
  }
  func.func @transform_6(%arg0: i32) -> (i32, i32) {
    %c0_i32 = arith.constant 0 : i32
    %c0_i32_0 = arith.constant 0 : i32
    return %arg0, %c0_i32 : i32, i32
  }
}

</mosaic_0001>

<llo_original>
// kernel: _shrinkage_call.1
$region0: #{_shrinkage_call.1}
  #allocation0 [shape = 'u32[]', space=smem, size = 0x4, offset = 0x4, fixed_abs, tag = 'smem constant byte address 0x4 - core index']
  #allocation1 [shape = 'u32[144,128]{1,0:T(1,128)}', space=vmem, size = 0x12000, scoped, tag = 'internal scratch']
  %s0 = inlined_call_operand.hbm [shape: f32[16,32], index: 0, kind: input, shape index: {}]
  %s1 = inlined_call_operand.hbm [shape: bf16[32,128], index: 1, kind: input, shape index: {}]
  %s2 = inlined_call_operand.hbm [shape: f32[1,128], index: 2, kind: input, shape index: {}]
  %s3 = inlined_call_operand.hbm [shape: f32[1,128], index: 3, kind: input, shape index: {}]
  %s4 = inlined_call_operand.hbm [shape: bf16[128,32], index: 4, kind: input, shape index: {}]
  %s5 = inlined_call_operand.hbm [shape: f32[1,32], index: 5, kind: input, shape index: {}]
  %s6 = inlined_call_operand.hbm [shape: f32[16,32], index: 6, kind: output, shape index: {}]
  %s7 = sld [smem:[#allocation0]]
  $region81: #{_shrinkage_call.1} parent=0
    _
  %s9 = ssub.s32 1, %s7
  %s10 = scalar_select 0, %s9, %s7
  $region1: #{_shrinkage_call.1} parent=0
    #allocation2 [shape = 'u8[8192]{0}', space=vmem, size = 0x2000, scoped, tag = 'input window, operand 0']
    #allocation3 [shape = 's32[2]{0}', space=sflag, size = 0x8, scoped, tag = 'scoped memory for _shrinkage_call.1']
    #allocation4 [shape = 's32[2]{0}', space=sflag, size = 0x8, scoped, tag = 'scoped memory for _shrinkage_call.1']
    #allocation5 [shape = 'u8[8192]{0}', space=vmem, size = 0x2000, scoped, tag = 'input window, operand 1, single buffered']
    #allocation6 [shape = 's32[1]{0}', space=sflag, size = 0x4, scoped, tag = 'scoped memory for _shrinkage_call.1']
    #allocation7 [shape = 'u8[512]{0}', space=vmem, size = 0x400, scoped, tag = 'input window, operand 2, single buffered']
    #allocation8 [shape = 'u8[512]{0}', space=vmem, size = 0x400, scoped, tag = 'input window, operand 3, single buffered']
    #allocation9 [shape = 's32[1]{0}', space=sflag, size = 0x4, scoped, tag = 'scoped memory for _shrinkage_call.1']
    #allocation10 [shape = 'u8[32768]{0}', space=vmem, size = 0x8000, scoped, tag = 'input window, operand 4, single buffered']
    #allocation11 [shape = 'u8[512]{0}', space=vmem, size = 0x400, scoped, tag = 'input window, operand 5, single buffered']
    #allocation12 [shape = 's32[1]{0}', space=sflag, size = 0x4, scoped, tag = 'scoped memory for _shrinkage_call.1']
    #allocation13 [shape = 'u8[8192]{0}', space=vmem, size = 0x2000, scoped, tag = 'output window, operand 0']
    %11 = vsyncpa [#allocation3], 0
    %s12 = scalar_lea.sflag [#allocation3], 1
    %13 = vsyncpa %s12, 0
    %14 = vsyncpa [#allocation6], 0
    %15 = vsyncpa [#allocation9], 0
    %16 = vsyncpa [#allocation12], 0
    %17 = vsyncpa [#allocation4], 0
    %s18 = scalar_lea.sflag [#allocation4], 1
    %19 = vsyncpa %s18, 0
    loop: start=0, step=1, limit=4
    $region2: #{_shrinkage_call.1} parent=1 // loop_pre_header
      _
    $region3: #{_shrinkage_call.1} parent=1 // loop_header
      %s21 = sphi 0, %s25
      %p22 = scmp.ge.s32.totalorder %s21, 4
      %s31 = sphi 0, %s33
      %s34 = sphi 0, %s31
      %s35 = sphi 0, %s34
      %s51 = sphi 0, %s35
      %s55 = sphi 0, %s55
      %s57 = sphi 0, %s55
      %s58 = sphi 0, %s57
      %s72 = sphi 0, %s58
      %s76 = sphi 0, %s76
      %s78 = sphi 0, %s76
      %s79 = sphi 0, %s78
      %s93 = sphi 0, %s79
      %s97 = sphi 0, %s97
      %s99 = sphi 0, %s97
      %s100 = sphi 0, %s99
      %s114 = sphi 0, %s100
      %s118 = sphi 0, %s118
      %s120 = sphi 0, %s118
      %s121 = sphi 0, %s120
      %s135 = sphi 0, %s121
      %s139 = sphi 0, %s139
      %s141 = sphi 0, %s139
      %s142 = sphi 0, %s141
      %s156 = sphi 0, %s142
      %s162 = sphi 0, %s164
      %s165 = sphi 0, %s162
      %s166 = sphi 0, %s165
      %s182 = sphi 0, %s166
    $region4: #{_shrinkage_call.1} parent=1 // loop_header_branch
      %24 = sbr.rel (%p22) target = $region8
    $region5: #{_shrinkage_call.1} parent=1 // loop_body
      %s26 = ssub.s32 %s21, 1
      %s27 = ssub.s32 %s21, 2
      %s28 = sadd.s32 %s21, 1
      %s29 = ssub.s32 %s21, %s28
      %p30 = scmp.eq.s32.totalorder %s29, 0
      %s32 = sadd.s32 %s31, 1
      %s33 = scalar_select %p30, %s31, %s32
      %p36 = pneg %p30
      %p37 = scmp.eq.s32.totalorder %s21, 1
      %p38 = por %p36, %p37
      %p39 = scmp.ne.s32.totalorder %s31, %s34
      %p40 = scmp.eq.s32.totalorder %s21, 0
      %p41 = por %p39, %p40
      %p42 = scmp.ne.s32.totalorder %s31, %s34
      %p43 = scmp.eq.s32.totalorder %s26, 1
      %p44 = por %p42, %p43
      %p45 = scmp.ne.s32.totalorder %s34, %s35
      %p46 = scmp.eq.s32.totalorder %s26, 0
      %p47 = por %p45, %p46
      %p48 = scmp.ne.s32.totalorder %s34, %s35
      %p49 = scmp.eq.s32.totalorder %s27, 1
      %p50 = por %p48, %p49
      %p52 = scmp.ne.s32.totalorder %s35, %s51
      %p53 = scmp.eq.s32.totalorder %s27, 0
      %p54 = por %p52, %p53
      %s56 = sadd.s32 %s55, 1
      %p59 = scmp.eq.s32.totalorder %s21, 1
      %p60 = scmp.ne.s32.totalorder %s55, %s57
      %p61 = scmp.eq.s32.totalorder %s21, 0
      %p62 = por %p60, %p61
      %p63 = scmp.ne.s32.totalorder %s55, %s57
      %p64 = scmp.eq.s32.totalorder %s26, 1
      %p65 = por %p63, %p64
      %p66 = scmp.ne.s32.totalorder %s57, %s58
      %p67 = scmp.eq.s32.totalorder %s26, 0
      %p68 = por %p66, %p67
      %p69 = scmp.ne.s32.totalorder %s57, %s58
      %p70 = scmp.eq.s32.totalorder %s27, 1
      %p71 = por %p69, %p70
      %p73 = scmp.ne.s32.totalorder %s58, %s72
      %p74 = scmp.eq.s32.totalorder %s27, 0
      %p75 = por %p73, %p74
      %s77 = sadd.s32 %s76, 1
      %p80 = scmp.eq.s32.totalorder %s21, 1
      %p81 = scmp.ne.s32.totalorder %s76, %s78
      %p82 = scmp.eq.s32.totalorder %s21, 0
      %p83 = por %p81, %p82
      %p84 = scmp.ne.s32.totalorder %s76, %s78
      %p85 = scmp.eq.s32.totalorder %s26, 1
      %p86 = por %p84, %p85
      %p87 = scmp.ne.s32.totalorder %s78, %s79
      %p88 = scmp.eq.s32.totalorder %s26, 0
      %p89 = por %p87, %p88
      %p90 = scmp.ne.s32.totalorder %s78, %s79
      %p91 = scmp.eq.s32.totalorder %s27, 1
      %p92 = por %p90, %p91
      %p94 = scmp.ne.s32.totalorder %s79, %s93
      %p95 = scmp.eq.s32.totalorder %s27, 0
      %p96 = por %p94, %p95
      %s98 = sadd.s32 %s97, 1
      %p101 = scmp.eq.s32.totalorder %s21, 1
      %p102 = scmp.ne.s32.totalorder %s97, %s99
      %p103 = scmp.eq.s32.totalorder %s21, 0
      %p104 = por %p102, %p103
      %p105 = scmp.ne.s32.totalorder %s97, %s99
      %p106 = scmp.eq.s32.totalorder %s26, 1
      %p107 = por %p105, %p106
      %p108 = scmp.ne.s32.totalorder %s99, %s100
      %p109 = scmp.eq.s32.totalorder %s26, 0
      %p110 = por %p108, %p109
      %p111 = scmp.ne.s32.totalorder %s99, %s100
      %p112 = scmp.eq.s32.totalorder %s27, 1
      %p113 = por %p111, %p112
      %p115 = scmp.ne.s32.totalorder %s100, %s114
      %p116 = scmp.eq.s32.totalorder %s27, 0
      %p117 = por %p115, %p116
      %s119 = sadd.s32 %s118, 1
      %p122 = scmp.eq.s32.totalorder %s21, 1
      %p123 = scmp.ne.s32.totalorder %s118, %s120
      %p124 = scmp.eq.s32.totalorder %s21, 0
      %p125 = por %p123, %p124
      %p126 = scmp.ne.s32.totalorder %s118, %s120
      %p127 = scmp.eq.s32.totalorder %s26, 1
      %p128 = por %p126, %p127
      %p129 = scmp.ne.s32.totalorder %s120, %s121
      %p130 = scmp.eq.s32.totalorder %s26, 0
      %p131 = por %p129, %p130
      %p132 = scmp.ne.s32.totalorder %s120, %s121
      %p133 = scmp.eq.s32.totalorder %s27, 1
      %p134 = por %p132, %p133
      %p136 = scmp.ne.s32.totalorder %s121, %s135
      %p137 = scmp.eq.s32.totalorder %s27, 0
      %p138 = por %p136, %p137
      %s140 = sadd.s32 %s139, 1
      %p143 = scmp.eq.s32.totalorder %s21, 1
      %p144 = scmp.ne.s32.totalorder %s139, %s141
      %p145 = scmp.eq.s32.totalorder %s21, 0
      %p146 = por %p144, %p145
      %p147 = scmp.ne.s32.totalorder %s139, %s141
      %p148 = scmp.eq.s32.totalorder %s26, 1
      %p149 = por %p147, %p148
      %p150 = scmp.ne.s32.totalorder %s141, %s142
      %p151 = scmp.eq.s32.totalorder %s26, 0
      %p152 = por %p150, %p151
      %p153 = scmp.ne.s32.totalorder %s141, %s142
      %p154 = scmp.eq.s32.totalorder %s27, 1
      %p155 = por %p153, %p154
      %p157 = scmp.ne.s32.totalorder %s142, %s156
      %p158 = scmp.eq.s32.totalorder %s27, 0
      %p159 = por %p157, %p158
      %s160 = ssub.s32 %s21, %s28
      %p161 = scmp.eq.s32.totalorder %s160, 0
      %s163 = sadd.s32 %s162, 1
      %s164 = scalar_select %p161, %s162, %s163
      %p167 = pneg %p161
      %p168 = scmp.eq.s32.totalorder %s21, 1
      %p169 = por %p167, %p168
      %p170 = scmp.ne.s32.totalorder %s162, %s165
      %p171 = scmp.eq.s32.totalorder %s21, 0
      %p172 = por %p170, %p171
      %p173 = scmp.ne.s32.totalorder %s162, %s165
      %p174 = scmp.eq.s32.totalorder %s26, 1
      %p175 = por %p173, %p174
      %p176 = scmp.ne.s32.totalorder %s165, %s166
      %p177 = scmp.eq.s32.totalorder %s26, 0
      %p178 = por %p176, %p177
      %p179 = scmp.ne.s32.totalorder %s165, %s166
      %p180 = scmp.eq.s32.totalorder %s27, 1
      %p181 = por %p179, %p180
      %p183 = scmp.ne.s32.totalorder %s166, %s182
      %p184 = scmp.eq.s32.totalorder %s27, 0
      %p185 = por %p183, %p184
      %p186 = scmp.le.s32.totalorder 1, %s21
      %p187 = scmp.lt.s32.totalorder %s21, 3
      %p188 = pnand %p186, %p187
      %p189 = pneg %p188
      // Predicated region
      $region9: #{_shrinkage_call.1} parent=5 // pred_check
        _
      $region10: #{_shrinkage_call.1} parent=5 // pred_check_branch
        %191 = sbr.rel (%p188) target = $region12
      $region11: #{_shrinkage_call.1} parent=5 // pred_region
        %s192 = ssub.s32 %s21, 1
        // Predicated region
        $region13: #{_shrinkage_call.1} parent=11 // pred_check
          %p193 = pneg %p68
        $region14: #{_shrinkage_call.1} parent=11 // pred_check_branch
          %195 = sbr.rel (%p193) target = $region16
        $region15: #{_shrinkage_call.1} parent=11 // pred_region
          %s197 = ssub.s32 256, 256
          %198 = vsyncadd [#allocation6], %s197
          %s199 = sshll.u32 [#allocation5], 4
          %s200 = int_to_ptr.vmem [resolvable:$true] %s199
          %205 = dma.hbm_to_vmem [thread:$0]  %s1, 256, %s200, [#allocation6], 64, 64, 4
        $region16: #{_shrinkage_call.1} parent=11 // pred_fallthru
          _
        // Predicated region
        $region17: #{_shrinkage_call.1} parent=11 // pred_check
          %p206 = pneg %p89
        $region18: #{_shrinkage_call.1} parent=11 // pred_check_branch
          %208 = sbr.rel (%p206) target = $region20
        $region19: #{_shrinkage_call.1} parent=11 // pred_region
          %s210 = ssub.s32 16, 16
          %211 = vsyncadd [#allocation6], %s210
          %s213 = sshll.u32 [#allocation7], 4
          %s214 = int_to_ptr.vmem [resolvable:$true] %s213
          %216 = dma.hbm_to_vmem [thread:$0]  %s2, 16, %s214, [#allocation6]
        $region20: #{_shrinkage_call.1} parent=11 // pred_fallthru
          _
        // Predicated region
        $region21: #{_shrinkage_call.1} parent=11 // pred_check
          %p217 = pneg %p110
        $region22: #{_shrinkage_call.1} parent=11 // pred_check_branch
          %219 = sbr.rel (%p217) target = $region24
        $region23: #{_shrinkage_call.1} parent=11 // pred_region
          %s221 = ssub.s32 16, 16
          %222 = vsyncadd [#allocation9], %s221
          %s224 = sshll.u32 [#allocation8], 4
          %s225 = int_to_ptr.vmem [resolvable:$true] %s224
          %227 = dma.hbm_to_vmem [thread:$0]  %s3, 16, %s225, [#allocation9]
        $region24: #{_shrinkage_call.1} parent=11 // pred_fallthru
          _
        // Predicated region
        $region25: #{_shrinkage_call.1} parent=11 // pred_check
          %p228 = pneg %p131
        $region26: #{_shrinkage_call.1} parent=11 // pred_check_branch
          %230 = sbr.rel (%p228) target = $region28
        $region27: #{_shrinkage_call.1} parent=11 // pred_region
          %s232 = ssub.s32 1024, 1024
          %233 = vsyncadd [#allocation9], %s232
          %s234 = sshll.u32 [#allocation10], 4
          %s235 = int_to_ptr.vmem [resolvable:$true] %s234
          %240 = dma.hbm_to_vmem [thread:$0]  %s4, 1024, %s235, [#allocation9], 64, 64, 4
        $region28: #{_shrinkage_call.1} parent=11 // pred_fallthru
          _
        // Predicated region
        $region29: #{_shrinkage_call.1} parent=11 // pred_check
          %p241 = pneg %p152
        $region30: #{_shrinkage_call.1} parent=11 // pred_check_branch
          %243 = sbr.rel (%p241) target = $region32
        $region31: #{_shrinkage_call.1} parent=11 // pred_region
          %s245 = ssub.s32 16, 16
          %246 = vsyncadd [#allocation12], %s245
          %s248 = sshll.u32 [#allocation11], 4
          %s249 = int_to_ptr.vmem [resolvable:$true] %s248
          %251 = dma.hbm_to_vmem [thread:$0]  %s5, 16, %s249, [#allocation12]
        $region32: #{_shrinkage_call.1} parent=11 // pred_fallthru
          _
      $region12: #{_shrinkage_call.1} parent=5 // pred_fallthru
        _
      %p252 = scmp.lt.s32.totalorder %s21, 2
      // Predicated region
      $region33: #{_shrinkage_call.1} parent=5 // pred_check
        %p253 = pneg %p252
      $region34: #{_shrinkage_call.1} parent=5 // pred_check_branch
        %255 = sbr.rel (%p253) target = $region36
      $region35: #{_shrinkage_call.1} parent=5 // pred_region
        // Predicated region
        $region37: #{_shrinkage_call.1} parent=35 // pred_check
          %p256 = pneg %p41
        $region38: #{_shrinkage_call.1} parent=35 // pred_check_branch
          %258 = sbr.rel (%p256) target = $region40
        $region39: #{_shrinkage_call.1} parent=35 // pred_region
          %s259 = sand.u32 %s31, 1
          %s260 = scalar_lea.sflag [#allocation3], %s259
          %s261 = sand.u32 %s31, 1
          %s262 = smul.addr %s261, 8
          %s263 = scalar_lea.vmem [#allocation2], %s262
          %s265 = ssub.s32 128, 128
          %266 = vsyncadd %s260, %s265
          %s267 = smul.addr %s21, 128
          %s268 = scalar_lea.hbm %s0, %s267
          %s270 = sshll.u32 %s263, 4
          %s271 = int_to_ptr.vmem [resolvable:$true] %s270
          %273 = dma.hbm_to_vmem [thread:$0]  %s268, 128, %s271, %s260
        $region40: #{_shrinkage_call.1} parent=35 // pred_fallthru
          _
      $region36: #{_shrinkage_call.1} parent=5 // pred_fallthru
        _
      %p274 = scmp.le.s32.totalorder 1, %s21
      %p275 = scmp.lt.s32.totalorder %s21, 3
      %p276 = pnand %p274, %p275
      %p277 = pneg %p276
      // Predicated region
      $region41: #{_shrinkage_call.1} parent=5 // pred_check
        _
      $region42: #{_shrinkage_call.1} parent=5 // pred_check_branch
        %279 = sbr.rel (%p276) target = $region44
      $region43: #{_shrinkage_call.1} parent=5 // pred_region
        %s280 = ssub.s32 %s21, 1
        %s281 = sand.u32 %s34, 1
        %s282 = scalar_lea.sflag [#allocation3], %s281
        %s283 = sand.u32 %s34, 1
        %s284 = smul.addr %s283, 8
        %s285 = scalar_lea.vmem [#allocation2], %s284
        // Predicated region
        $region45: #{_shrinkage_call.1} parent=43 // pred_check
          %p286 = pneg %p47
        $region46: #{_shrinkage_call.1} parent=43 // pred_check_branch
          %288 = sbr.rel (%p286) target = $region48
        $region47: #{_shrinkage_call.1} parent=43 // pred_region
          %289 = dma.done %s282, 128
        $region48: #{_shrinkage_call.1} parent=43 // pred_fallthru
          _
        // Predicated region
        $region49: #{_shrinkage_call.1} parent=43 // pred_check
          %p290 = pneg %p68
        $region50: #{_shrinkage_call.1} parent=43 // pred_check_branch
          %292 = sbr.rel (%p290) target = $region52
        $region51: #{_shrinkage_call.1} parent=43 // pred_region
          %293 = dma.done [#allocation6], 256
        $region52: #{_shrinkage_call.1} parent=43 // pred_fallthru
          _
        // Predicated region
        $region53: #{_shrinkage_call.1} parent=43 // pred_check
          %p294 = pneg %p89
        $region54: #{_shrinkage_call.1} parent=43 // pred_check_branch
          %296 = sbr.rel (%p294) target = $region56
        $region55: #{_shrinkage_call.1} parent=43 // pred_region
          %297 = dma.done [#allocation6], 16
        $region56: #{_shrinkage_call.1} parent=43 // pred_fallthru
          _
        // Predicated region
        $region57: #{_shrinkage_call.1} parent=43 // pred_check
          %p298 = pneg %p110
        $region58: #{_shrinkage_call.1} parent=43 // pred_check_branch
          %300 = sbr.rel (%p298) target = $region60
        $region59: #{_shrinkage_call.1} parent=43 // pred_region
          %301 = dma.done [#allocation9], 16
        $region60: #{_shrinkage_call.1} parent=43 // pred_fallthru
          _
        // Predicated region
        $region61: #{_shrinkage_call.1} parent=43 // pred_check
          %p302 = pneg %p131
        $region62: #{_shrinkage_call.1} parent=43 // pred_check_branch
          %304 = sbr.rel (%p302) target = $region64
        $region63: #{_shrinkage_call.1} parent=43 // pred_region
          %305 = dma.done [#allocation9], 1024
        $region64: #{_shrinkage_call.1} parent=43 // pred_fallthru
          _
        // Predicated region
        $region65: #{_shrinkage_call.1} parent=43 // pred_check
          %p306 = pneg %p152
        $region66: #{_shrinkage_call.1} parent=43 // pred_check_branch
          %308 = sbr.rel (%p306) target = $region68
        $region67: #{_shrinkage_call.1} parent=43 // pred_region
          %309 = dma.done [#allocation12], 16
        $region68: #{_shrinkage_call.1} parent=43 // pred_fallthru
          _
        %s310 = sand.u32 %s34, 1
        %s311 = scalar_lea.sflag [#allocation3], %s310
        %s312 = sand.u32 %s34, 1
        %s313 = smul.addr %s312, 8
        %s314 = scalar_lea.vmem [#allocation2], %s313
        %p315 = pneg %p47
        %p316 = pneg %p44
        %p317 = pneg %p68
        %p318 = pneg %p65
        %p319 = pneg %p89
        %p320 = pneg %p86
        %p321 = pneg %p110
        %p322 = pneg %p107
        %p323 = pneg %p131
        %p324 = pneg %p128
        %p325 = pneg %p152
        %p326 = pneg %p149
        %p327 = pneg %p178
        %p328 = pneg %p175
        %s329 = sand.u32 %s165, 1
        %s330 = scalar_lea.sflag [#allocation4], %s329
        %s331 = sand.u32 %s165, 1
        %s332 = smul.addr %s331, 8
        %s333 = scalar_lea.vmem [#allocation13], %s332
        %v335 = vld [vmem:[%s285] sm:$0xff]
        %v336 = vand.u32 2147483647, %v335
        %vm337 = vcmask 261120
        %v338 = vsel %vm337, %v336, 0.0
        %339 = vadd.xlane.f32.xlu0 %v338
        %v340 = vpop.xlane.xlu0 %339
        %v341 = vmul.f32 %v340, 0.03125
        %v342 = vpack.c.bf16 %v335, %v335
        %v343 = vld [vmem:[#allocation5] sm:$0xf]
        %v344 = vld [vmem:[#allocation5 + $0x4] sm:$0xf]
        %v345 = vld [vmem:[#allocation5 + $0x8] sm:$0xf]
        %v346 = vld [vmem:[#allocation5 + $0xc] sm:$0xf]
        %v347 = vld [vmem:[#allocation7] sm:$0x1]
        %v349 = vlaneseq
        %v350 = vshrl.u32 %v349, 7
        %v351 = vsub.s32 0, %v350
        %v352 = vrot.slane %v347, %v351
        %v358 = vunpack.c.l.b16 %v343
        %v359 = vunpack.c.l.b16 %v344
        %v360 = vunpack.c.l.b16 %v345
        %v361 = vunpack.c.l.b16 %v346
        %v362 = vpack.c.b16 %v359, %v358
        %v363 = vpack.c.b16 %v361, %v360
        %v367 = vsel %vm337, %v342, 0
        %369 = vmatprep.subr.bf16.mxu0 0
        %370 = vmatpush1.bf16.msra.mxu0 %v362
        %371 = vmatprep.subr.bf16.mxu0 0
        %372 = vmatpush1.bf16.msra.mxu0 %v363
        %373 = vmatprep.subr.bf16.mxu0 0
        %374 = vmatpush1.bf16.msra.mxu0 0
        %375 = vmatprep.subr.bf16.mxu0 0
        %376 = vmatpush1.bf16.msra.mxu0 0
        %377 = vmatprep.subr.bf16.mxu0 0
        %378 = vmatpush1.bf16.msra.mxu0 0
        %379 = vmatprep.subr.bf16.mxu0 0
        %380 = vmatpush1.bf16.msra.mxu0 0
        %381 = vmatprep.subr.bf16.mxu0 0
        %382 = vmatpush1.bf16.msra.mxu0 0
        %383 = vmatprep.subr.bf16.mxu0 0
        %384 = vmatpush1.bf16.msra.mxu0 0
        %385 = vmatprep.subr.bf16.mxu0 0
        %386 = vmatpush1.bf16.msra.mxu0 0
        %387 = vmatprep.subr.bf16.mxu0 0
        %388 = vmatpush1.bf16.msra.mxu0 0
        %389 = vmatprep.subr.bf16.mxu0 0
        %390 = vmatpush1.bf16.msra.mxu0 0
        %391 = vmatprep.subr.bf16.mxu0 0
        %392 = vmatpush1.bf16.msra.mxu0 0
        %393 = vmatprep.subr.bf16.mxu0 0
        %394 = vmatpush1.bf16.msra.mxu0 0
        %395 = vmatprep.subr.bf16.mxu0 0
        %396 = vmatpush1.bf16.msra.mxu0 0
        %397 = vmatprep.subr.bf16.mxu0 0
        %398 = vmatpush1.bf16.msra.mxu0 0
        %399 = vmatprep.subr.bf16.mxu0 0
        %400 = vmatpush1.bf16.msra.mxu0 0
        %401 = vmatprep.mubr.bf16.mxu0 0
        %402 = vmatmul.mubr.bf16.gmra.mrb[0].mxu0 %v367
        %v403 = vpop.f32.mrb[0].mxu0
        %v404 = vadd.f32 %v352, %v403
        %v405 = vpop.f32.mrb[0].mxu0
        %v406 = vpop.f32.mrb[0].mxu0
        %v407 = vpop.f32.mrb[0].mxu0
        %408 = vdwg.mxu0
        %v409 = vmul.f32 %v404, %v404
        %410 = vadd.xlane.f32.xlu0 %v409
        %v411 = vpop.xlane.xlu0 %410
        %v412 = vmul.f32 %v411, 0.03125
        %v413 = vadd.f32 %v412, 1.1920929e-07
        %v414 = vrsqrt.pop %v413
        %v415 = vmul.f32 %v404, %v414
        %v416 = vld [vmem:[#allocation8] sm:$0x1]
        %v418 = vlaneseq
        %v419 = vshrl.u32 %v418, 7
        %v420 = vsub.s32 0, %v419
        %v421 = vrot.slane %v416, %v420
        %v423 = vmul.f32 %v415, %v421
        %v424 = vmax.f32 %v423, 0.0
        %v425 = vpack.c.bf16 %v424, %v424
        %v426 = vld [vmem:[#allocation10] sm:$0xf]
        %v427 = vld [vmem:[#allocation10 + $0x4] sm:$0xf]
        %v428 = vld [vmem:[#allocation10 + $0x8] sm:$0xf]
        %v429 = vld [vmem:[#allocation10 + $0xc] sm:$0xf]
        %v430 = vld [vmem:[#allocation10 + $0x10] sm:$0xf]
        %v431 = vld [vmem:[#allocation10 + $0x14] sm:$0xf]
        %v432 = vld [vmem:[#allocation10 + $0x18] sm:$0xf]
        %v433 = vld [vmem:[#allocation10 + $0x1c] sm:$0xf]
        %v434 = vld [vmem:[#allocation10 + $0x20] sm:$0xf]
        %v435 = vld [vmem:[#allocation10 + $0x24] sm:$0xf]
        %v436 = vld [vmem:[#allocation10 + $0x28] sm:$0xf]
        %v437 = vld [vmem:[#allocation10 + $0x2c] sm:$0xf]
        %v438 = vld [vmem:[#allocation10 + $0x30] sm:$0xf]
        %v439 = vld [vmem:[#allocation10 + $0x34] sm:$0xf]
        %v440 = vld [vmem:[#allocation10 + $0x38] sm:$0xf]
        %v441 = vld [vmem:[#allocation10 + $0x3c] sm:$0xf]
        %v442 = vld [vmem:[#allocation11] sm:$0x1]
        %v444 = vlaneseq
        %v445 = vshrl.u32 %v444, 7
        %v446 = vsub.s32 0, %v445
        %v447 = vrot.slane %v442, %v446
        %v465 = vunpack.c.l.b16 %v426
        %v466 = vunpack.c.l.b16 %v427
        %v467 = vunpack.c.l.b16 %v428
        %v468 = vunpack.c.l.b16 %v429
        %v469 = vunpack.c.l.b16 %v430
        %v470 = vunpack.c.l.b16 %v431
        %v471 = vunpack.c.l.b16 %v432
        %v472 = vunpack.c.l.b16 %v433
        %v473 = vunpack.c.l.b16 %v434
        %v474 = vunpack.c.l.b16 %v435
        %v475 = vunpack.c.l.b16 %v436
        %v476 = vunpack.c.l.b16 %v437
        %v477 = vunpack.c.l.b16 %v438
        %v478 = vunpack.c.l.b16 %v439
        %v479 = vunpack.c.l.b16 %v440
        %v480 = vunpack.c.l.b16 %v441
        %v481 = vpack.c.b16 %v466, %v465
        %v482 = vpack.c.b16 %v468, %v467
        %v483 = vpack.c.b16 %v470, %v469
        %v484 = vpack.c.b16 %v472, %v471
        %v485 = vpack.c.b16 %v474, %v473
        %v486 = vpack.c.b16 %v476, %v475
        %v487 = vpack.c.b16 %v478, %v477
        %v488 = vpack.c.b16 %v480, %v479
        %497 = vmatprep.subr.bf16.mxu0 0
        %498 = vmatpush1.bf16.msra.mxu0 %v481
        %499 = vmatprep.subr.bf16.mxu0 0
        %500 = vmatpush1.bf16.msra.mxu0 %v482
        %501 = vmatprep.subr.bf16.mxu0 0
        %502 = vmatpush1.bf16.msra.mxu0 %v483
        %503 = vmatprep.subr.bf16.mxu0 0
        %504 = vmatpush1.bf16.msra.mxu0 %v484
        %505 = vmatprep.subr.bf16.mxu0 0
        %506 = vmatpush1.bf16.msra.mxu0 %v485
        %507 = vmatprep.subr.bf16.mxu0 0
        %508 = vmatpush1.bf16.msra.mxu0 %v486
        %509 = vmatprep.subr.bf16.mxu0 0
        %510 = vmatpush1.bf16.msra.mxu0 %v487
        %511 = vmatprep.subr.bf16.mxu0 0
        %512 = vmatpush1.bf16.msra.mxu0 %v488
        %513 = vmatprep.subr.bf16.mxu0 0
        %514 = vmatpush1.bf16.msra.mxu0 0
        %515 = vmatprep.subr.bf16.mxu0 0
        %516 = vmatpush1.bf16.msra.mxu0 0
        %517 = vmatprep.subr.bf16.mxu0 0
        %518 = vmatpush1.bf16.msra.mxu0 0
        %519 = vmatprep.subr.bf16.mxu0 0
        %520 = vmatpush1.bf16.msra.mxu0 0
        %521 = vmatprep.subr.bf16.mxu0 0
        %522 = vmatpush1.bf16.msra.mxu0 0
        %523 = vmatprep.subr.bf16.mxu0 0
        %524 = vmatpush1.bf16.msra.mxu0 0
        %525 = vmatprep.subr.bf16.mxu0 0
        %526 = vmatpush1.bf16.msra.mxu0 0
        %527 = vmatprep.subr.bf16.mxu0 0
        %528 = vmatpush1.bf16.msra.mxu0 0
        %529 = vmatprep.mubr.bf16.mxu0 0
        %530 = vmatmul.mubr.bf16.gmra.mrb[0].mxu0 %v425
        %v531 = vpop.f32.mrb[0].mxu0
        %v532 = vadd.f32 %v447, %v531
        %v533 = vpop.f32.mrb[0].mxu0
        %v534 = vpop.f32.mrb[0].mxu0
        %v535 = vpop.f32.mrb[0].mxu0
        %536 = vdwg.mxu0
        %v537 = vxor.u32 %v532, 2147483648
        %v538 = vmul.f32 %v537, 1.442695
        %v539 = vpow.pop %v538
        %v540 = vadd.f32 %v539, 1.0
        %v541 = vrcp.pop %v540
        %v542 = vmul.f32 1.0, %v541
        %v543 = vmul.f32 %v341, %v542
        %v544 = vsub.f32 %v336, %v543
        %v545 = vmax.f32 %v544, 0.0
        %vm546 = vcmp.lt.f32.partialorder %v335, 0.0
        %v547 = vsub.f32 0.0, %v545
        %v548 = vsel %vm546, %v547, %v545
        %549 = vst.msk [vmem:[%s333] sm:$0xff] %vm337, %v548
        %s550 = sand.u32 %s165, 1
        %s551 = scalar_lea.sflag [#allocation4], %s550
        %s552 = sand.u32 %s165, 1
        %s553 = smul.addr %s552, 8
        %s554 = scalar_lea.vmem [#allocation13], %s553
        // Predicated region
        $region69: #{_shrinkage_call.1} parent=43 // pred_check
          %p555 = pneg %p175
        $region70: #{_shrinkage_call.1} parent=43 // pred_check_branch
          %557 = sbr.rel (%p555) target = $region72
        $region71: #{_shrinkage_call.1} parent=43 // pred_region
          %s559 = ssub.s32 128, 128
          %560 = vsyncadd %s551, %s559
          %s561 = smul.addr %s26, 128
          %s562 = scalar_lea.hbm %s6, %s561
          %s564 = sshll.u32 %s554, 4
          %s565 = int_to_ptr.vmem [resolvable:$true] %s564
          %567 = dma.vmem_to_hbm [thread:$0]  %s565, 128, %s562, %s551
        $region72: #{_shrinkage_call.1} parent=43 // pred_fallthru
          _
      $region44: #{_shrinkage_call.1} parent=5 // pred_fallthru
        _
      %p568 = scmp.le.s32.totalorder 2, %s21
      // Predicated region
      $region73: #{_shrinkage_call.1} parent=5 // pred_check
        %p569 = pneg %p568
      $region74: #{_shrinkage_call.1} parent=5 // pred_check_branch
        %571 = sbr.rel (%p569) target = $region76
      $region75: #{_shrinkage_call.1} parent=5 // pred_region
        %s572 = ssub.s32 %s21, 2
        // Predicated region
        $region77: #{_shrinkage_call.1} parent=75 // pred_check
          %p573 = pneg %p181
        $region78: #{_shrinkage_call.1} parent=75 // pred_check_branch
          %575 = sbr.rel (%p573) target = $region80
        $region79: #{_shrinkage_call.1} parent=75 // pred_region
          %s576 = sand.u32 %s166, 1
          %s577 = scalar_lea.sflag [#allocation4], %s576
          %s578 = sand.u32 %s166, 1
          %s579 = smul.addr %s578, 8
          %s580 = scalar_lea.vmem [#allocation13], %s579
          %581 = dma.done %s577, 128
        $region80: #{_shrinkage_call.1} parent=75 // pred_fallthru
          _
      $region76: #{_shrinkage_call.1} parent=5 // pred_fallthru
        _
    $region6: #{_shrinkage_call.1} parent=1 // loop_footer
      %s25 = sadd.s32 1, %s21
    $region7: #{_shrinkage_call.1} parent=1 // loop_footer_branch
      %20 = sbr.rel target = $region3
    $region8: #{_shrinkage_call.1} parent=1 // loop_exit
      _
    %582 = vsyncpa [#allocation3], 1
    %s583 = scalar_lea.sflag [#allocation3], 1
    %584 = vsyncpa %s583, 1
    %585 = vsyncpa [#allocation6], 1
    %586 = vsyncpa [#allocation9], 1
    %587 = vsyncpa [#allocation12], 1
    %588 = vsyncpa [#allocation4], 1
    %s589 = scalar_lea.sflag [#allocation4], 1
    %590 = vsyncpa %s589, 1

</llo_original>
